<compile_context>
chip_gen: v7x
topology: tpu7x:2x2x1
jax: 0.10.0
libtpu: 0.0.40
codegen_flags: <defaults>
</compile_context>

<pallas_src>
import functools

import jax
import jax.numpy as jnp
import numpy as np
from jax import lax
from jax.experimental import pallas as pl
from jax.experimental.pallas import tpu as pltpu


def _router_topk_kernel(x_ref, w_ref, w_out_ref, i_out_ref, *, top_k):
    """One token tile.

    x_ref     : (TILE_N, H)      tokens, storage dtype (bf16/f32) straight to MXU
    w_ref     : (E, H)           router weight, nn.Linear layout
    w_out_ref : (top_k, TILE_N)  expert weights (transposed, lane-dense stores)
    i_out_ref : (top_k, TILE_N)  expert indices, int32 (same layout)
    """
    # logits^T = W @ x^T  -> (E, TILE_N) directly from the MXU, f32 accumulation.
    # Both operands contract on their last (lane) dim -- same pattern as q @ k^T
    # in flash attention, so Mosaic does not materialize an x^T copy.
    logits_t = lax.dot_general(
        w_ref[...], x_ref[...],
        dimension_numbers=(((1,), (1,)), ((), ())),
        preferred_element_type=jnp.float32)                    # (E, T)
    num_experts, tile_n = logits_t.shape

    # Unnormalized softmax numerator (monotone in the softmax): defer the divide.
    m = jnp.max(logits_t, axis=0, keepdims=True)               # (1, T)
    e = jnp.exp(logits_t - m)                                  # (E, T)
    # Exact reciprocal of the denominator (approx=False keeps weights bit-close
    # to a true softmax); one (1, T) op instead of an (E, T) divide.
    inv_denom = pl.reciprocal(jnp.sum(e, axis=0, keepdims=True), approx=False)

    # Iterative top-k over the tiny expert axis; ties resolve to lowest index
    # (torch.topk tie order is unspecified; values are unaffected).
    row_ids = lax.broadcasted_iota(jnp.int32, (num_experts, tile_n), 0)
    work = e
    val_rows = []
    idx_rows = []
    for _ in range(top_k):
        max_val = jnp.max(work, axis=0, keepdims=True)         # (1, T)
        is_max = work == max_val
        idx = jnp.min(jnp.where(is_max, row_ids, num_experts),
                      axis=0, keepdims=True)                   # (1, T) int32
        val_rows.append(max_val * inv_denom)                   # normalize only winners
        idx_rows.append(idx)
        work = jnp.where(row_ids == idx, -jnp.inf, work)

    # one lane-dense store per output (last dim = TILE_N)
    w_out_ref[...] = jnp.concatenate(val_rows, axis=0).astype(w_out_ref.dtype)
    i_out_ref[...] = jnp.concatenate(idx_rows, axis=0)


def _tpu_vmem_and_multi_tc():
    """(per-TensorCore VMEM bytes, has-multiple-TensorCores) -- conservative on unknown."""
    kind = ""
    try:
        kind = (getattr(jax.devices()[0], "device_kind", "") or "").lower()
    except Exception:
        pass
    if (not kind) or ("7" in kind):
        # v7x (or unknown -> be conservative): 64 MiB VMEM per TC, 2 TCs/chip.
        return 64 * 1024 * 1024, True
    # v5e / v6e: 128 MiB VMEM, single TensorCore.
    return 128 * 1024 * 1024, False


def topk_token_choice_router_forward(x, weight, *, top_k=2):
    """x: (seq, batch, hidden); weight: (num_experts, hidden) — nn.Linear layout.

    Returns (expert_weights (N, top_k) in x.dtype, expert_indices (N, top_k) int32)
    with N = seq * batch, matching TopKTokenChoiceRouter.forward.
    """
    sl, bs, hs = x.shape
    num_experts = weight.shape[0]
    n = sl * bs
    x2d = x.reshape(n, hs)

    itemsize = jnp.dtype(x.dtype).itemsize
    w_itemsize = jnp.dtype(weight.dtype).itemsize

    vmem_cap, multi_tc = _tpu_vmem_and_multi_tc()
    if vmem_cap <= 64 * 1024 * 1024:
        pair_budget = 20 * 1024 * 1024   # x double-buffer pair (v7x: 64 MiB VMEM)
        vmem_clamp = 32 * 1024 * 1024
    else:
        pair_budget = 40 * 1024 * 1024   # v5e/v6e: 128 MiB VMEM
        vmem_clamp = 48 * 1024 * 1024

    # Byte-based tile sizing: one x buffer ~ pair_budget / 2, rows a multiple of
    # 128 (output lane-dim constraint). The 128-row floor only exceeds the byte
    # budget for extremely large H, which the vmem_limit safeguard below covers.
    rows = (pair_budget // 2) // max(1, hs * itemsize)
    tile_n = max(128, (rows // 128) * 128)

    n_pad128 = pl.cdiv(n, 128) * 128
    if multi_tc and n_pad128 >= 256:
        # Guarantee >= 2 grid steps so the "parallel" axis spans both TensorCores.
        tile_n = min(tile_n, max(128, (n_pad128 // 256) * 128))

    if n <= tile_n:
        # single tile: pad token count to a sublane multiple, block == full array
        n_pad = ((n + 7) // 8) * 8
        tile_n = n_pad
    else:
        n_pad = pl.cdiv(n, tile_n) * tile_n
    if n_pad != n:
        x2d = jnp.pad(x2d, ((0, n_pad - n), (0, 0)))
    grid = (n_pad // tile_n,)

    kernel = functools.partial(_router_topk_kernel, top_k=top_k)

    # VMEM budget: double-buffered x tile + weight + outputs + f32 temporaries.
    vmem_need = (2 * tile_n * hs * itemsize
                 + 2 * num_experts * hs * w_itemsize
                 + 2 * 2 * top_k * tile_n * 4
                 + 8 * num_experts * tile_n * 4)
    vmem_limit = int(min(max(vmem_need + 4 * 1024 * 1024, 8 * 1024 * 1024),
                         vmem_clamp))
    if vmem_need + 2 * 1024 * 1024 > vmem_limit:
        # Very large H with the 128-row floor: never under-request vs. actual need.
        vmem_limit = int(min(vmem_need + 4 * 1024 * 1024, vmem_cap))

    cost = pl.CostEstimate(
        flops=2 * n_pad * hs * num_experts,
        transcendentals=n_pad * num_experts,
        bytes_accessed=(n_pad * hs * itemsize
                        + num_experts * hs * w_itemsize
                        + 2 * n_pad * top_k * 4),
    )

    wt_out, idx_out = pl.pallas_call(
        kernel,
        out_shape=(jax.ShapeDtypeStruct((top_k, n_pad), x.dtype),
                   jax.ShapeDtypeStruct((top_k, n_pad), jnp.int32)),
        grid=grid,
        in_specs=[
            pl.BlockSpec((tile_n, hs), lambda i: (i, 0)),
            pl.BlockSpec((num_experts, hs), lambda i: (0, 0)),
        ],
        out_specs=(
            pl.BlockSpec((top_k, tile_n), lambda i: (0, i)),
            pl.BlockSpec((top_k, tile_n), lambda i: (0, i)),
        ),
        compiler_params=pltpu.CompilerParams(
            dimension_semantics=("parallel",),
            vmem_limit_bytes=vmem_limit),
        cost_estimate=cost,
    )(x2d, weight)

    # TODO(synk): downstream consumers could take the (top_k, N) layout directly
    # to avoid this extra XLA transpose pass.
    expert_weights = wt_out.T[:n]
    expert_indices = idx_out.T[:n]
    return expert_weights, expert_indices


if __name__ == "__main__":
    key = jax.random.PRNGKey(0)
    kx, kw = jax.random.split(key)

    # neox_args: seq_length=8, micro_batch=2, hidden_size=32,
    #            moe_num_experts=8, moe_top_k=2, params_dtype=float32
    seq, bs, hidden, num_experts, top_k = 8, 2, 32, 8, 2

    x = jax.random.normal(kx, (seq, bs, hidden), dtype=jnp.float32)
    weight = jax.random.normal(kw, (num_experts, hidden), dtype=jnp.float32) * 0.02

    expert_weights, expert_indices = topk_token_choice_router_forward(
        x, weight, top_k=top_k)
    jax.block_until_ready((expert_weights, expert_indices))

    # pure-JAX reference: softmax(x @ W^T) -> top-k
    logits_ref = x.reshape(-1, hidden) @ weight.T
    scores_ref = jax.nn.softmax(logits_ref, axis=-1)
    ref_w, ref_i = lax.top_k(scores_ref, top_k)
    np.testing.assert_allclose(np.asarray(expert_weights), np.asarray(ref_w),
                               rtol=1e-5, atol=1e-5)
    np.testing.assert_array_equal(np.asarray(expert_indices), np.asarray(ref_i))

    print("KERNEL_OK")
</pallas_src>

<mosaic_0001>
module attributes {stable_mosaic.version = 11 : i64} {
  func.func @_router_topk_kernel(%arg0: i32, %arg1: memref<16x32xf32, #tpu.memory_space<vmem>>, %arg2: memref<8x32xf32, #tpu.memory_space<vmem>>, %arg3: memref<2x16xf32, #tpu.memory_space<vmem>>, %arg4: memref<2x16xi32, #tpu.memory_space<vmem>>) attributes {dimension_semantics = [#tpu.dimension_semantics<parallel>], iteration_bounds = array<i64: 1>, scalar_prefetch = 0 : i64, scratch_operands = 0 : i64, tpu.core_type = #tpu.core_type<tc>, window_params = [{transform_indices = @transform_0, window_bounds = array<i64: 16, 32>}, {pipeline_mode = #tpu.pipeline_mode<synchronous>, transform_indices = @transform_1, window_bounds = array<i64: 8, 32>}, {transform_indices = @transform_2, window_bounds = array<i64: 2, 16>}, {transform_indices = @transform_3, window_bounds = array<i64: 2, 16>}]} {
    %c0 = arith.constant 0 : index
    %c0_0 = arith.constant 0 : index
    %0 = vector.load %arg2[%c0, %c0_0] : memref<8x32xf32, #tpu.memory_space<vmem>>, vector<8x32xf32>
    %c0_1 = arith.constant 0 : index
    %c0_2 = arith.constant 0 : index
    %1 = vector.load %arg1[%c0_1, %c0_2] : memref<16x32xf32, #tpu.memory_space<vmem>>, vector<16x32xf32>
    %cst = arith.constant dense<0.000000e+00> : vector<8x16xf32>
    %2 = tpu.matmul %0, %1, %cst {dimension_numbers = #tpu.dot_dimension_numbers<[1], [1], [0], [0], [0, 0, 1, 0], [], []>} : vector<8x32xf32>, vector<16x32xf32>, vector<8x16xf32> -> vector<8x16xf32>
    %cst_3 = arith.constant dense<0xFF800000> : vector<16xf32>
    %3 = vector.multi_reduction <maximumf>, %2, %cst_3 [0] : vector<8x16xf32> to vector<16xf32>
    %4 = vector.shape_cast %3 : vector<16xf32> to vector<1x16xf32>
    %5 = vector.broadcast %4 : vector<1x16xf32> to vector<8x16xf32>
    %6 = arith.subf %2, %5 : vector<8x16xf32>
    %7 = math.exp %6 : vector<8x16xf32>
    %cst_4 = arith.constant dense<0.000000e+00> : vector<16xf32>
    %8 = vector.multi_reduction <add>, %7, %cst_4 [0] : vector<8x16xf32> to vector<16xf32>
    %9 = vector.shape_cast %8 : vector<16xf32> to vector<1x16xf32>
    %10 = tpu.reciprocal %9 : vector<1x16xf32> -> vector<1x16xf32>
    %11 = tpu.iota {dimensions = array<i32: 0>} : vector<8x16xi32>
    %cst_5 = arith.constant dense<0xFF800000> : vector<16xf32>
    %12 = vector.multi_reduction <maximumf>, %7, %cst_5 [0] : vector<8x16xf32> to vector<16xf32>
    %13 = vector.shape_cast %12 : vector<16xf32> to vector<1x16xf32>
    %14 = vector.broadcast %13 : vector<1x16xf32> to vector<8x16xf32>
    %15 = arith.cmpf oeq, %7, %14 : vector<8x16xf32>
    %c8_i32 = arith.constant 8 : i32
    %16 = vector.broadcast %c8_i32 : i32 to vector<8x16xi32>
    %17 = arith.select %15, %11, %16 : vector<8x16xi1>, vector<8x16xi32>
    %cst_6 = arith.constant dense<2147483647> : vector<16xi32>
    %18 = vector.multi_reduction <minsi>, %17, %cst_6 [0] : vector<8x16xi32> to vector<16xi32>
    %19 = vector.shape_cast %18 : vector<16xi32> to vector<1x16xi32>
    %20 = arith.mulf %13, %10 : vector<1x16xf32>
    %21 = vector.broadcast %19 : vector<1x16xi32> to vector<8x16xi32>
    %22 = arith.cmpi eq, %11, %21 : vector<8x16xi32>
    %cst_7 = arith.constant 0xFF800000 : f32
    %23 = vector.broadcast %cst_7 : f32 to vector<8x16xf32>
    %24 = arith.select %22, %23, %7 : vector<8x16xi1>, vector<8x16xf32>
    %cst_8 = arith.constant dense<0xFF800000> : vector<16xf32>
    %25 = vector.multi_reduction <maximumf>, %24, %cst_8 [0] : vector<8x16xf32> to vector<16xf32>
    %26 = vector.shape_cast %25 : vector<16xf32> to vector<1x16xf32>
    %27 = vector.broadcast %26 : vector<1x16xf32> to vector<8x16xf32>
    %28 = arith.cmpf oeq, %24, %27 : vector<8x16xf32>
    %c8_i32_9 = arith.constant 8 : i32
    %29 = vector.broadcast %c8_i32_9 : i32 to vector<8x16xi32>
    %30 = arith.select %28, %11, %29 : vector<8x16xi1>, vector<8x16xi32>
    %cst_10 = arith.constant dense<2147483647> : vector<16xi32>
    %31 = vector.multi_reduction <minsi>, %30, %cst_10 [0] : vector<8x16xi32> to vector<16xi32>
    %32 = vector.shape_cast %31 : vector<16xi32> to vector<1x16xi32>
    %33 = arith.mulf %26, %10 : vector<1x16xf32>
    %34 = tpu.concatenate %20, %33 in 0 : vector<1x16xf32>, vector<1x16xf32> -> vector<2x16xf32>
    %c0_11 = arith.constant 0 : index
    %c0_12 = arith.constant 0 : index
    %35 = vector.load %arg3[%c0_11, %c0_12] : memref<2x16xf32, #tpu.memory_space<vmem>>, vector<2x16xf32>
    tpu.vector_store %arg3[%c0_11, %c0_12], %34 {strides = array<i32>} : memref<2x16xf32, #tpu.memory_space<vmem>>, vector<2x16xf32>,
    %36 = tpu.concatenate %19, %32 in 0 : vector<1x16xi32>, vector<1x16xi32> -> vector<2x16xi32>
    %c0_13 = arith.constant 0 : index
    %c0_14 = arith.constant 0 : index
    %37 = vector.load %arg4[%c0_13, %c0_14] : memref<2x16xi32, #tpu.memory_space<vmem>>, vector<2x16xi32>
    tpu.vector_store %arg4[%c0_13, %c0_14], %36 {strides = array<i32>} : memref<2x16xi32, #tpu.memory_space<vmem>>, vector<2x16xi32>,
    return
  }
  func.func @transform_0(%arg0: i32) -> (i32, i32) {
    %c0_i32 = arith.constant 0 : i32
    %c0_i32_0 = arith.constant 0 : i32
    return %arg0, %c0_i32 : i32, i32
  }
  func.func @transform_1(%arg0: i32) -> (i32, i32) {
    %c0_i32 = arith.constant 0 : i32
    %c0_i32_0 = arith.constant 0 : i32
    %c0_i32_1 = arith.constant 0 : i32
    return %c0_i32, %c0_i32_0 : i32, i32
  }
  func.func @transform_2(%arg0: i32) -> (i32, i32) {
    %c0_i32 = arith.constant 0 : i32
    %c0_i32_0 = arith.constant 0 : i32
    return %c0_i32, %arg0 : i32, i32
  }
  func.func @transform_3(%arg0: i32) -> (i32, i32) {
    %c0_i32 = arith.constant 0 : i32
    %c0_i32_0 = arith.constant 0 : i32
    return %c0_i32, %arg0 : i32, i32
  }
}

</mosaic_0001>

<llo_original>
// kernel: tpu_custom_call.1
$region0: #{tpu_custom_call.1}
  #allocation0 [shape = 'u32[]', space=smem, size = 0x4, offset = 0x4, fixed_abs, tag = 'smem constant byte address 0x4 - core index']
  #allocation1 [shape = 'u32[144,128]{1,0:T(1,128)}', space=vmem, size = 0x12000, scoped, tag = 'internal scratch']
  %s0 = inlined_call_operand.hbm [shape: f32[16,32], index: 0, kind: input, shape index: {}]
  %s1 = inlined_call_operand.hbm [shape: f32[8,32], index: 1, kind: input, shape index: {}]
  %s2 = inlined_call_operand.hbm [shape: f32[2,16], index: 2, kind: output, shape index: {0}]
  %s3 = inlined_call_operand.hbm [shape: s32[2,16], index: 3, kind: output, shape index: {1}]
  %4 = xla_tuple %s2, %s3
  %s5 = sld [smem:[#allocation0]]
  $region34: #{tpu_custom_call.1} parent=0
    _
  %s7 = ssub.s32 1, %s5
  %s8 = scalar_select 0, %s7, %s5
  $region1: #{tpu_custom_call.1} parent=0
    #allocation2 [shape = 'u8[8192]{0}', space=vmem, size = 0x2000, scoped, tag = 'input window, operand 0, single buffered']
    #allocation3 [shape = 's32[1]{0}', space=sflag, size = 0x4, scoped, tag = 'scoped memory for tpu_custom_call.1']
    #allocation4 [shape = 's32[1]{0}', space=sflag, size = 0x4, scoped, tag = 'scoped memory for tpu_custom_call.1']
    #allocation5 [shape = 'u8[4096]{0}', space=vmem, size = 0x1000, scoped, tag = 'input window, operand 1, single buffered']
    #allocation6 [shape = 's32[1]{0}', space=sflag, size = 0x4, scoped, tag = 'scoped memory for tpu_custom_call.1']
    #allocation7 [shape = 'u8[1024]{0}', space=vmem, size = 0x400, scoped, tag = 'output window, operand 0, single buffered']
    #allocation8 [shape = 'u8[1024]{0}', space=vmem, size = 0x400, scoped, tag = 'output window, operand 1, single buffered']
    #allocation9 [shape = 's32[1]{0}', space=sflag, size = 0x4, scoped, tag = 'scoped memory for tpu_custom_call.1']
    %9 = vsyncpa [#allocation3], 0
    %10 = vsyncpa [#allocation6], 0
    %11 = vsyncpa [#allocation4], 0
    %12 = vsyncpa [#allocation9], 0
    // Predicated region
    $region2: #{tpu_custom_call.1} parent=1 // pred_check
      _
    $region3: #{tpu_custom_call.1} parent=1 // pred_check_branch
      %14 = sbr.rel (0) target = $region5
    $region4: #{tpu_custom_call.1} parent=1 // pred_region
      %s16 = ssub.s32 256, 256
      %17 = vsyncadd [#allocation3], %s16
      %s18 = sshll.u32 [#allocation2], 4
      %s19 = int_to_ptr.vmem [resolvable:$true] %s18
      %24 = dma.hbm_to_vmem [thread:$0]  %s0, 256, %s19, [#allocation3], 128, 128, 8
    $region5: #{tpu_custom_call.1} parent=1 // pred_fallthru
      _
    // Predicated region
    $region6: #{tpu_custom_call.1} parent=1 // pred_check
      _
    $region7: #{tpu_custom_call.1} parent=1 // pred_check_branch
      %26 = sbr.rel (0) target = $region9
    $region8: #{tpu_custom_call.1} parent=1 // pred_region
      %s28 = ssub.s32 128, 128
      %29 = vsyncadd [#allocation6], %s28
      %s31 = sshll.u32 [#allocation5], 4
      %s32 = int_to_ptr.vmem [resolvable:$true] %s31
      %34 = dma.hbm_to_vmem [thread:$0]  %s1, 128, %s32, [#allocation6]
    $region9: #{tpu_custom_call.1} parent=1 // pred_fallthru
      _
    // Predicated region
    $region10: #{tpu_custom_call.1} parent=1 // pred_check
      _
    $region11: #{tpu_custom_call.1} parent=1 // pred_check_branch
      %36 = sbr.rel (0) target = $region13
    $region12: #{tpu_custom_call.1} parent=1 // pred_region
      %37 = dma.done [#allocation3], 256
    $region13: #{tpu_custom_call.1} parent=1 // pred_fallthru
      _
    // Predicated region
    $region14: #{tpu_custom_call.1} parent=1 // pred_check
      _
    $region15: #{tpu_custom_call.1} parent=1 // pred_check_branch
      %39 = sbr.rel (0) target = $region17
    $region16: #{tpu_custom_call.1} parent=1 // pred_region
      %40 = dma.done [#allocation6], 128
    $region17: #{tpu_custom_call.1} parent=1 // pred_fallthru
      _
    %v41 = vld [vmem:[#allocation5] sm:$0xff]
    %v42 = vld [vmem:[#allocation2] sm:$0xff]
    %v43 = vld [vmem:[#allocation2 + $0x8] sm:$0xff]
    %vm44 = vcmask 261120
    %v46 = vsel %vm44, %v41, 0
    %v49 = vsel %vm44, %v42, 0
    %v52 = vsel %vm44, %v43, 0
    %54 = vmatprep.subr.mxu0 0.0
    %55 = vmatpush1.xpose.msra.mxu0 %v49
    %56 = vmatprep.subr.mxu0 0.0
    %57 = vmatpush1.xpose.msra.mxu0 %v52
    %58 = vmatprep.subr.mxu0 0.0
    %59 = vmatpush1.xpose.msra.mxu0 0.0
    %60 = vmatprep.subr.mxu0 0.0
    %61 = vmatpush1.xpose.msra.mxu0 0.0
    %62 = vmatprep.subr.mxu0 0.0
    %63 = vmatpush1.xpose.msra.mxu0 0.0
    %64 = vmatprep.subr.mxu0 0.0
    %65 = vmatpush1.xpose.msra.mxu0 0.0
    %66 = vmatprep.subr.mxu0 0.0
    %67 = vmatpush1.xpose.msra.mxu0 0.0
    %68 = vmatprep.subr.mxu0 0.0
    %69 = vmatpush1.xpose.msra.mxu0 0.0
    %70 = vmatprep.subr.mxu0 0.0
    %71 = vmatpush1.xpose.msra.mxu0 0.0
    %72 = vmatprep.subr.mxu0 0.0
    %73 = vmatpush1.xpose.msra.mxu0 0.0
    %74 = vmatprep.subr.mxu0 0.0
    %75 = vmatpush1.xpose.msra.mxu0 0.0
    %76 = vmatprep.subr.mxu0 0.0
    %77 = vmatpush1.xpose.msra.mxu0 0.0
    %78 = vmatprep.subr.mxu0 0.0
    %79 = vmatpush1.xpose.msra.mxu0 0.0
    %80 = vmatprep.subr.mxu0 0.0
    %81 = vmatpush1.xpose.msra.mxu0 0.0
    %82 = vmatprep.subr.mxu0 0.0
    %83 = vmatpush1.xpose.msra.mxu0 0.0
    %84 = vmatprep.subr.mxu0 0.0
    %85 = vmatpush1.xpose.msra.mxu0 0.0
    %86 = vmatprep.subr.mxu0 0.0
    %87 = vmatpush1.xpose.msra.mxu0 0.0
    %88 = vmatprep.subr.mxu0 0.0
    %89 = vmatpush1.xpose.msra.mxu0 0.0
    %90 = vmatprep.subr.mxu0 0.0
    %91 = vmatpush1.xpose.msra.mxu0 0.0
    %92 = vmatprep.subr.mxu0 0.0
    %93 = vmatpush1.xpose.msra.mxu0 0.0
    %94 = vmatprep.subr.mxu0 0.0
    %95 = vmatpush1.xpose.msra.mxu0 0.0
    %96 = vmatprep.subr.mxu0 0.0
    %97 = vmatpush1.xpose.msra.mxu0 0.0
    %98 = vmatprep.subr.mxu0 0.0
    %99 = vmatpush1.xpose.msra.mxu0 0.0
    %100 = vmatprep.subr.mxu0 0.0
    %101 = vmatpush1.xpose.msra.mxu0 0.0
    %102 = vmatprep.subr.mxu0 0.0
    %103 = vmatpush1.xpose.msra.mxu0 0.0
    %104 = vmatprep.subr.mxu0 0.0
    %105 = vmatpush1.xpose.msra.mxu0 0.0
    %106 = vmatprep.subr.mxu0 0.0
    %107 = vmatpush1.xpose.msra.mxu0 0.0
    %108 = vmatprep.subr.mxu0 0.0
    %109 = vmatpush1.xpose.msra.mxu0 0.0
    %110 = vmatprep.subr.mxu0 0.0
    %111 = vmatpush1.xpose.msra.mxu0 0.0
    %112 = vmatprep.subr.mxu0 0.0
    %113 = vmatpush1.xpose.msra.mxu0 0.0
    %114 = vmatprep.subr.mxu0 0.0
    %115 = vmatpush1.xpose.msra.mxu0 0.0
    %116 = vmatprep.subr.mxu0 0.0
    %117 = vmatpush1.xpose.msra.mxu0 0.0
    %118 = vmatprep.mubr.f32.mxu0 0.0
    %119 = vmatmul.mubr.f32.gmra.mrb[0].mxu0 %v46
    %v120 = vpop.f32.mrb[0].mxu0
    %v121 = vadd.f32 0.0, %v120
    %v122 = vpop.f32.mrb[0].mxu0
    %123 = vdwg.mxu0
    %vm124 = vcmask 130048
    %v125 = vsel %vm124, %v121, -inf
    %v126 = vrot.slane %v125, 4
    %v127 = vmax.f32 %v125, %v126
    %v128 = vrot.slane %v127, 2
    %v129 = vmax.f32 %v127, %v128
    %v130 = vrot.slane %v129, 1
    %v131 = vmax.f32 %v129, %v130
    %v132 = vsub.f32 %v121, %v131
    %v133 = vmul.f32 %v132, 1.442695
    %v134 = vpow.pop %v133
    %v135 = vsel %vm124, %v134, 0.0
    %v136 = vrot.slane %v135, 4
    %v137 = vadd.f32 %v135, %v136
    %v138 = vrot.slane %v137, 2
    %v139 = vadd.f32 %v137, %v138
    %v140 = vrot.slane %v139, 1
    %v141 = vadd.f32 %v139, %v140
    %v142 = vrcp.pop %v141
    %v143 = vlaneseq
    %v144 = vshrl.u32 %v143, 7
    %v145 = vsel %vm124, %v134, -inf
    %v146 = vrot.slane %v145, 4
    %v147 = vmax.f32 %v145, %v146
    %v148 = vrot.slane %v147, 2
    %v149 = vmax.f32 %v147, %v148
    %v150 = vrot.slane %v149, 1
    %v151 = vmax.f32 %v149, %v150
    %vm152 = vcmp.eq.f32.partialorder %v134, %v151
    %v153 = vsel %vm152, %v144, 8
    %v154 = vsel %vm124, %v153, 2147483647
    %v155 = vrot.slane %v154, 4
    %vm156 = vcmp.lt.s32.totalorder %v154, %v155
    %v157 = vsel %vm156, %v154, %v155
    %v158 = vrot.slane %v157, 2
    %vm159 = vcmp.lt.s32.totalorder %v157, %v158
    %v160 = vsel %vm159, %v157, %v158
    %v161 = vrot.slane %v160, 1
    %vm162 = vcmp.lt.s32.totalorder %v160, %v161
    %v163 = vsel %vm162, %v160, %v161
    %v164 = vmul.f32 %v151, %v142
    %vm165 = vcmp.eq.s32.totalorder %v144, %v163
    %v166 = vsel %vm165, -inf, %v134
    %v167 = vsel %vm124, %v166, -inf
    %v168 = vrot.slane %v167, 4
    %v169 = vmax.f32 %v167, %v168
    %v170 = vrot.slane %v169, 2
    %v171 = vmax.f32 %v169, %v170
    %v172 = vrot.slane %v171, 1
    %v173 = vmax.f32 %v171, %v172
    %vm174 = vcmp.eq.f32.partialorder %v166, %v173
    %v175 = vsel %vm174, %v144, 8
    %v176 = vsel %vm124, %v175, 2147483647
    %v177 = vrot.slane %v176, 4
    %vm178 = vcmp.lt.s32.totalorder %v176, %v177
    %v179 = vsel %vm178, %v176, %v177
    %v180 = vrot.slane %v179, 2
    %vm181 = vcmp.lt.s32.totalorder %v179, %v180
    %v182 = vsel %vm181, %v179, %v180
    %v183 = vrot.slane %v182, 1
    %vm184 = vcmp.lt.s32.totalorder %v182, %v183
    %v185 = vsel %vm184, %v182, %v183
    %v186 = vmul.f32 %v173, %v142
    %vm187 = vcmask 1040384
    %v188 = vsel %vm187, %v164, %v186
    %vm189 = vcmask 123904
    %190 = vst.msk [vmem:[#allocation7] sm:$0x3] %vm189, %v188
    %v191 = vsel %vm187, %v163, %v185
    %192 = vst.msk [vmem:[#allocation8] sm:$0x3] %vm189, %v191
    // Predicated region
    $region18: #{tpu_custom_call.1} parent=1 // pred_check
      _
    $region19: #{tpu_custom_call.1} parent=1 // pred_check_branch
      %194 = sbr.rel (0) target = $region21
    $region20: #{tpu_custom_call.1} parent=1 // pred_region
      %s196 = ssub.s32 32, 32
      %197 = vsyncadd [#allocation4], %s196
      %s199 = sshll.u32 [#allocation7], 4
      %s200 = int_to_ptr.vmem [resolvable:$true] %s199
      %202 = dma.vmem_to_hbm [thread:$0]  %s200, 32, %s2, [#allocation4]
    $region21: #{tpu_custom_call.1} parent=1 // pred_fallthru
      _
    // Predicated region
    $region22: #{tpu_custom_call.1} parent=1 // pred_check
      _
    $region23: #{tpu_custom_call.1} parent=1 // pred_check_branch
      %204 = sbr.rel (0) target = $region25
    $region24: #{tpu_custom_call.1} parent=1 // pred_region
      %s206 = ssub.s32 32, 32
      %207 = vsyncadd [#allocation9], %s206
      %s209 = sshll.u32 [#allocation8], 4
      %s210 = int_to_ptr.vmem [resolvable:$true] %s209
      %212 = dma.vmem_to_hbm [thread:$0]  %s210, 32, %s3, [#allocation9]
    $region25: #{tpu_custom_call.1} parent=1 // pred_fallthru
      _
    // Predicated region
    $region26: #{tpu_custom_call.1} parent=1 // pred_check
      _
    $region27: #{tpu_custom_call.1} parent=1 // pred_check_branch
      %214 = sbr.rel (0) target = $region29
    $region28: #{tpu_custom_call.1} parent=1 // pred_region
      %215 = dma.done [#allocation4], 32
    $region29: #{tpu_custom_call.1} parent=1 // pred_fallthru
      _
    // Predicated region
    $region30: #{tpu_custom_call.1} parent=1 // pred_check
      _
    $region31: #{tpu_custom_call.1} parent=1 // pred_check_branch
      %217 = sbr.rel (0) target = $region33
    $region32: #{tpu_custom_call.1} parent=1 // pred_region
      %218 = dma.done [#allocation9], 32
    $region33: #{tpu_custom_call.1} parent=1 // pred_fallthru
      _
    %219 = vsyncpa [#allocation3], 1
    %220 = vsyncpa [#allocation6], 1
    %221 = vsyncpa [#allocation4], 1
    %222 = vsyncpa [#allocation9], 1

</llo_original>
